<compile_context>
chip_gen: v6e
topology: v6e:2x2x1
jax: 0.10.0
libtpu: 0.0.40
codegen_flags: <defaults>
</compile_context>

<pallas_src>
import functools

import jax
import jax.numpy as jnp
from jax.experimental import pallas as pl
from jax.experimental.pallas import tpu as pltpu

LANE = 128      # TPU lane width (last-dim tiling)
SUBLANE = 8     # TPU sublane width (second-to-last-dim tiling)


def _round_up(x, m):
    return (x + m - 1) // m * m


def _mlp_kernel(x_ref, w1_ref, b1_ref, w2_ref, b2_ref, w3_ref, b3_ref, o_ref):
    # Cast to bf16 for the MXU here (no separate XLA pad/cast pass in HBM).
    x = x_ref[...].astype(jnp.bfloat16)
    # fc1 + relu : bf16 MXU matmul, f32 accumulate, bias/ReLU in f32
    h1 = jnp.dot(x, w1_ref[...], preferred_element_type=jnp.float32)
    h1 = jnp.maximum(h1 + b1_ref[...], 0.0)
    # fc2 + relu
    h2 = jnp.dot(h1.astype(jnp.bfloat16), w2_ref[...],
                 preferred_element_type=jnp.float32)
    h2 = jnp.maximum(h2 + b2_ref[...], 0.0)
    # fc3 + relu (the PyTorch module applies ReLU on the final layer too)
    h3 = jnp.dot(h2.astype(jnp.bfloat16), w3_ref[...],
                 preferred_element_type=jnp.float32)
    h3 = jnp.maximum(h3 + b3_ref[...], 0.0)
    o_ref[...] = h3.astype(o_ref.dtype)


@functools.partial(jax.jit, static_argnames=("out_dim", "tm", "out_dtype"))
def domain_identifier_forward(x, packed, *, out_dim=2, tm=None,
                              out_dtype=jnp.bfloat16):
    """Pallas forward pass.

    x      : (B, feat_dim) float32 — passed to the kernel as-is (no padding).
    packed : dict of lane-padded params from `pack_params`
             w{i} : bf16 (K, N_pad), b{i} : f32 (1, N_pad)
    returns: (B, out_dim) float32
    """
    B, D = x.shape
    Dk, d1p = packed["w1"].shape
    assert Dk == D, "w1 input dim must match feature dim"
    d2p = packed["w2"].shape[1]
    d3p = packed["w3"].shape[1]

    # Batch tile:
    #  * small B  -> one grid step (e.g. B=16 -> (16, D) tile)
    #  * large B  -> >=512-row tiles for HBM-roofline efficiency, but always
    #    >= 2 grid steps so v7x's second TensorCore shares the parallel axis.
    if tm is None:
        b8 = _round_up(B, SUBLANE)
        if b8 <= 256:
            tm = b8
        else:
            tm = min(512, _round_up((b8 + 1) // 2, SUBLANE))
    grid = pl.cdiv(B, tm)

    resident = lambda shape: pl.BlockSpec(shape, lambda i: (0, 0))

    # Advisory cost hint: helps XLA schedule/overlap this tiny, HBM-bound op.
    flops = 2 * B * (D * d1p + d1p * d2p + d2p * d3p)
    bytes_accessed = (
        x.size * x.dtype.itemsize
        + sum(v.size * v.dtype.itemsize for v in packed.values())
        + B * d3p * jnp.dtype(out_dtype).itemsize)
    cost = pl.CostEstimate(flops=flops, transcendentals=0,
                           bytes_accessed=bytes_accessed)

    out = pl.pallas_call(
        _mlp_kernel,
        out_shape=jax.ShapeDtypeStruct((B, d3p), out_dtype),
        grid_spec=pltpu.PrefetchScalarGridSpec(
            num_scalar_prefetch=0,
            grid=(grid,),
            in_specs=[
                pl.BlockSpec((tm, D), lambda i: (i, 0)),    # x (batch-tiled)
                resident((D, d1p)), resident((1, d1p)),     # fc1 weight / bias
                resident((d1p, d2p)), resident((1, d2p)),   # fc2 weight / bias
                resident((d2p, d3p)), resident((1, d3p)),   # fc3 weight / bias
            ],
            out_specs=pl.BlockSpec((tm, d3p), lambda i: (i, 0)),  # lane-dense out
        ),
        compiler_params=pltpu.CompilerParams(
            dimension_semantics=("parallel",),
        ),
        cost_estimate=cost,
    )(x, packed["w1"], packed["b1"], packed["w2"], packed["b2"],
      packed["w3"], packed["b3"])

    # Slice out the real logits.  This is a tiny fused slice+cast; consumers
    # that want zero post-processing can consume the padded (B, 128) block.
    return out[:, :out_dim].astype(jnp.float32)


def init_params(key, feat_dim):
    """nn.Linear-style init: uniform(-1/sqrt(fan_in), 1/sqrt(fan_in)), f32."""
    dims = [feat_dim, feat_dim // 4, feat_dim // 16, 2]
    params = {}
    keys = jax.random.split(key, 6)
    for li, (din, dout) in enumerate(zip(dims[:-1], dims[1:]), start=1):
        bound = 1.0 / (din ** 0.5)
        params[f"w{li}"] = jax.random.uniform(
            keys[2 * (li - 1)], (din, dout), minval=-bound, maxval=bound,
            dtype=jnp.float32)
        params[f"b{li}"] = jax.random.uniform(
            keys[2 * (li - 1) + 1], (1, dout), minval=-bound, maxval=bound,
            dtype=jnp.float32)
    return params


def pack_params(params):
    """Zero-pad each layer's output width (and matching next-layer input width)
    to the 128-lane multiple; weights -> bf16, biases stay f32.  w1's input dim
    is left at feat_dim so unpadded activations feed the kernel directly."""
    packed = {}
    prev_out_pad = None
    for li in (1, 2, 3):
        w = params[f"w{li}"]
        b = params[f"b{li}"]
        din, dout = w.shape
        din_p = din if li == 1 else prev_out_pad
        dout_p = _round_up(dout, LANE)
        wp = jnp.zeros((din_p, dout_p), jnp.float32).at[:din, :dout].set(w)
        bp = jnp.zeros((1, dout_p), jnp.float32).at[:, :dout].set(b)
        packed[f"w{li}"] = wp.astype(jnp.bfloat16)
        packed[f"b{li}"] = bp
        prev_out_pad = dout_p
    return packed


def reference_forward_bf16(x, packed, out_dim=2):
    """Same numerics as the kernel (bf16 MXU inputs, f32 accumulation)."""
    xb = x.astype(jnp.bfloat16)
    h = jnp.maximum(jnp.dot(xb, packed["w1"],
                            preferred_element_type=jnp.float32) + packed["b1"], 0.0)
    h = jnp.maximum(jnp.dot(h.astype(jnp.bfloat16), packed["w2"],
                            preferred_element_type=jnp.float32) + packed["b2"], 0.0)
    h = jnp.maximum(jnp.dot(h.astype(jnp.bfloat16), packed["w3"],
                            preferred_element_type=jnp.float32) + packed["b3"], 0.0)
    return h[:, :out_dim]


def reference_forward_f32(x, params):
    h = jnp.maximum(x @ params["w1"] + params["b1"], 0.0)
    h = jnp.maximum(h @ params["w2"] + params["b2"], 0.0)
    h = jnp.maximum(h @ params["w3"] + params["b3"], 0.0)
    return h


if __name__ == "__main__":
    # Small shapes consistent with the module: feat_dim=512 -> 128 -> 32 -> 2.
    FEAT_DIM = 512
    BATCH = 16

    key = jax.random.PRNGKey(0)
    kx, kp = jax.random.split(key)
    x = jax.random.normal(kx, (BATCH, FEAT_DIM), dtype=jnp.float32)

    params = init_params(kp, FEAT_DIM)
    packed = pack_params(params)

    out = domain_identifier_forward(x, packed)
    out = jax.block_until_ready(out)
    assert out.shape == (BATCH, 2)

    # Same-numerics reference (bf16 MXU inputs / f32 accumulation); kernel
    # additionally rounds its output to bf16, hence the ~1e-2 tolerance.
    ref_bf16 = reference_forward_bf16(x, packed)
    assert jnp.allclose(out, ref_bf16, atol=1e-2, rtol=1e-2), \
        "mismatch vs bf16 JAX reference"

    # Sanity check against the full-f32 PyTorch-equivalent math (loose tol for bf16).
    ref_f32 = reference_forward_f32(x, params)
    assert jnp.allclose(out, ref_f32, atol=5e-2, rtol=5e-2), \
        "mismatch vs f32 JAX reference"

    print("KERNEL_OK")
</pallas_src>

<mosaic_0001>
module attributes {stable_mosaic.version = 11 : i64} {
  func.func @_mlp_kernel(%arg0: i32, %arg1: memref<16x512xf32, #tpu.memory_space<vmem>>, %arg2: memref<512x128xbf16, #tpu.memory_space<vmem>>, %arg3: memref<1x128xf32, #tpu.memory_space<vmem>>, %arg4: memref<128x128xbf16, #tpu.memory_space<vmem>>, %arg5: memref<1x128xf32, #tpu.memory_space<vmem>>, %arg6: memref<128x128xbf16, #tpu.memory_space<vmem>>, %arg7: memref<1x128xf32, #tpu.memory_space<vmem>>, %arg8: memref<16x128xbf16, #tpu.memory_space<vmem>>) attributes {dimension_semantics = [#tpu.dimension_semantics<parallel>], iteration_bounds = array<i64: 1>, scalar_prefetch = 0 : i64, scratch_operands = 0 : i64, tpu.core_type = #tpu.core_type<tc>, window_params = [{transform_indices = @transform_0, window_bounds = array<i64: 16, 512>}, {pipeline_mode = #tpu.pipeline_mode<synchronous>, transform_indices = @transform_1, window_bounds = array<i64: 512, 128>}, {pipeline_mode = #tpu.pipeline_mode<synchronous>, transform_indices = @transform_2, window_bounds = array<i64: 1, 128>}, {pipeline_mode = #tpu.pipeline_mode<synchronous>, transform_indices = @transform_3, window_bounds = array<i64: 128, 128>}, {pipeline_mode = #tpu.pipeline_mode<synchronous>, transform_indices = @transform_4, window_bounds = array<i64: 1, 128>}, {pipeline_mode = #tpu.pipeline_mode<synchronous>, transform_indices = @transform_5, window_bounds = array<i64: 128, 128>}, {pipeline_mode = #tpu.pipeline_mode<synchronous>, transform_indices = @transform_6, window_bounds = array<i64: 1, 128>}, {transform_indices = @transform_7, window_bounds = array<i64: 16, 128>}]} {
    %c0 = arith.constant 0 : index
    %c0_0 = arith.constant 0 : index
    %0 = vector.load %arg1[%c0, %c0_0] : memref<16x512xf32, #tpu.memory_space<vmem>>, vector<16x512xf32>
    %1 = arith.truncf %0 : vector<16x512xf32> to vector<16x512xbf16>
    %c0_1 = arith.constant 0 : index
    %c0_2 = arith.constant 0 : index
    %2 = vector.load %arg2[%c0_1, %c0_2] : memref<512x128xbf16, #tpu.memory_space<vmem>>, vector<512x128xbf16>
    %cst = arith.constant dense<0.000000e+00> : vector<16x128xf32>
    %3 = tpu.matmul %1, %2, %cst {dimension_numbers = #tpu.dot_dimension_numbers<[1], [0], [0], [1], [0, 0, 1, 1], [], []>} : vector<16x512xbf16>, vector<512x128xbf16>, vector<16x128xf32> -> vector<16x128xf32>
    %c0_3 = arith.constant 0 : index
    %c0_4 = arith.constant 0 : index
    %4 = vector.load %arg3[%c0_3, %c0_4] : memref<1x128xf32, #tpu.memory_space<vmem>>, vector<1x128xf32>
    %5 = vector.broadcast %4 : vector<1x128xf32> to vector<16x128xf32>
    %6 = arith.addf %3, %5 : vector<16x128xf32>
    %cst_5 = arith.constant 0.000000e+00 : f32
    %7 = vector.broadcast %cst_5 : f32 to vector<16x128xf32>
    %8 = arith.maximumf %6, %7 : vector<16x128xf32>
    %9 = arith.truncf %8 : vector<16x128xf32> to vector<16x128xbf16>
    %c0_6 = arith.constant 0 : index
    %c0_7 = arith.constant 0 : index
    %10 = vector.load %arg4[%c0_6, %c0_7] : memref<128x128xbf16, #tpu.memory_space<vmem>>, vector<128x128xbf16>
    %cst_8 = arith.constant dense<0.000000e+00> : vector<16x128xf32>
    %11 = tpu.matmul %9, %10, %cst_8 {dimension_numbers = #tpu.dot_dimension_numbers<[1], [0], [0], [1], [0, 0, 1, 1], [], []>} : vector<16x128xbf16>, vector<128x128xbf16>, vector<16x128xf32> -> vector<16x128xf32>
    %c0_9 = arith.constant 0 : index
    %c0_10 = arith.constant 0 : index
    %12 = vector.load %arg5[%c0_9, %c0_10] : memref<1x128xf32, #tpu.memory_space<vmem>>, vector<1x128xf32>
    %13 = vector.broadcast %12 : vector<1x128xf32> to vector<16x128xf32>
    %14 = arith.addf %11, %13 : vector<16x128xf32>
    %cst_11 = arith.constant 0.000000e+00 : f32
    %15 = vector.broadcast %cst_11 : f32 to vector<16x128xf32>
    %16 = arith.maximumf %14, %15 : vector<16x128xf32>
    %17 = arith.truncf %16 : vector<16x128xf32> to vector<16x128xbf16>
    %c0_12 = arith.constant 0 : index
    %c0_13 = arith.constant 0 : index
    %18 = vector.load %arg6[%c0_12, %c0_13] : memref<128x128xbf16, #tpu.memory_space<vmem>>, vector<128x128xbf16>
    %cst_14 = arith.constant dense<0.000000e+00> : vector<16x128xf32>
    %19 = tpu.matmul %17, %18, %cst_14 {dimension_numbers = #tpu.dot_dimension_numbers<[1], [0], [0], [1], [0, 0, 1, 1], [], []>} : vector<16x128xbf16>, vector<128x128xbf16>, vector<16x128xf32> -> vector<16x128xf32>
    %c0_15 = arith.constant 0 : index
    %c0_16 = arith.constant 0 : index
    %20 = vector.load %arg7[%c0_15, %c0_16] : memref<1x128xf32, #tpu.memory_space<vmem>>, vector<1x128xf32>
    %21 = vector.broadcast %20 : vector<1x128xf32> to vector<16x128xf32>
    %22 = arith.addf %19, %21 : vector<16x128xf32>
    %cst_17 = arith.constant 0.000000e+00 : f32
    %23 = vector.broadcast %cst_17 : f32 to vector<16x128xf32>
    %24 = arith.maximumf %22, %23 : vector<16x128xf32>
    %25 = arith.truncf %24 : vector<16x128xf32> to vector<16x128xbf16>
    %c0_18 = arith.constant 0 : index
    %c0_19 = arith.constant 0 : index
    %26 = vector.load %arg8[%c0_18, %c0_19] : memref<16x128xbf16, #tpu.memory_space<vmem>>, vector<16x128xbf16>
    tpu.vector_store %arg8[%c0_18, %c0_19], %25 {strides = array<i32>} : memref<16x128xbf16, #tpu.memory_space<vmem>>, vector<16x128xbf16>,
    return
  }
  func.func @transform_0(%arg0: i32) -> (i32, i32) {
    %c0_i32 = arith.constant 0 : i32
    %c0_i32_0 = arith.constant 0 : i32
    return %arg0, %c0_i32 : i32, i32
  }
  func.func @transform_1(%arg0: i32) -> (i32, i32) {
    %c0_i32 = arith.constant 0 : i32
    %c0_i32_0 = arith.constant 0 : i32
    %c0_i32_1 = arith.constant 0 : i32
    return %c0_i32, %c0_i32_0 : i32, i32
  }
  func.func @transform_2(%arg0: i32) -> (i32, i32) {
    %c0_i32 = arith.constant 0 : i32
    %c0_i32_0 = arith.constant 0 : i32
    %c0_i32_1 = arith.constant 0 : i32
    return %c0_i32, %c0_i32_0 : i32, i32
  }
  func.func @transform_3(%arg0: i32) -> (i32, i32) {
    %c0_i32 = arith.constant 0 : i32
    %c0_i32_0 = arith.constant 0 : i32
    %c0_i32_1 = arith.constant 0 : i32
    return %c0_i32, %c0_i32_0 : i32, i32
  }
  func.func @transform_4(%arg0: i32) -> (i32, i32) {
    %c0_i32 = arith.constant 0 : i32
    %c0_i32_0 = arith.constant 0 : i32
    %c0_i32_1 = arith.constant 0 : i32
    return %c0_i32, %c0_i32_0 : i32, i32
  }
  func.func @transform_5(%arg0: i32) -> (i32, i32) {
    %c0_i32 = arith.constant 0 : i32
    %c0_i32_0 = arith.constant 0 : i32
    %c0_i32_1 = arith.constant 0 : i32
    return %c0_i32, %c0_i32_0 : i32, i32
  }
  func.func @transform_6(%arg0: i32) -> (i32, i32) {
    %c0_i32 = arith.constant 0 : i32
    %c0_i32_0 = arith.constant 0 : i32
    %c0_i32_1 = arith.constant 0 : i32
    return %c0_i32, %c0_i32_0 : i32, i32
  }
  func.func @transform_7(%arg0: i32) -> (i32, i32) {
    %c0_i32 = arith.constant 0 : i32
    %c0_i32_0 = arith.constant 0 : i32
    return %arg0, %c0_i32 : i32, i32
  }
}

</mosaic_0001>

<llo_original>
// kernel: domain_identifier_forward.1
$region0: #{domain_identifier_forward.1}
  #allocation0 [shape = 'u32[]', space=smem, size = 0x4, offset = 0x4, fixed_abs, tag = 'smem constant byte address 0x4 - core index']
  #allocation1 [shape = 'u32[144,128]{1,0:T(1,128)}', space=vmem, size = 0x12000, scoped, tag = 'internal scratch']
  %s0 = inlined_call_operand.hbm [shape: f32[16,512], index: 0, kind: input, shape index: {}]
  %s1 = inlined_call_operand.hbm [shape: bf16[512,128], index: 1, kind: input, shape index: {}]
  %s2 = inlined_call_operand.vmem [shape: f32[1,128], index: 2, kind: input, shape index: {}]
  %s3 = inlined_call_operand.hbm [shape: bf16[128,128], index: 3, kind: input, shape index: {}]
  %s4 = inlined_call_operand.vmem [shape: f32[1,128], index: 4, kind: input, shape index: {}]
  %s5 = inlined_call_operand.hbm [shape: bf16[128,128], index: 5, kind: input, shape index: {}]
  %s6 = inlined_call_operand.vmem [shape: f32[1,128], index: 6, kind: input, shape index: {}]
  %s7 = inlined_call_operand.vmem [shape: bf16[16,128], index: 7, kind: output, shape index: {}]
  %s8 = sld [smem:[#allocation0]]
  $region54: #{domain_identifier_forward.1} parent=0
    _
  %s10 = ssub.s32 1, %s8
  %s11 = scalar_select 0, %s10, %s8
  $region1: #{domain_identifier_forward.1} parent=0
    #allocation2 [shape = 'u8[32768]{0}', space=vmem, size = 0x8000, scoped, tag = 'input window, operand 0, single buffered']
    #allocation3 [shape = 's32[1]{0}', space=sflag, size = 0x4, scoped, tag = 'scoped memory for domain_identifier_forward.1']
    #allocation4 [shape = 'u8[131072]{0}', space=vmem, size = 0x20000, scoped, tag = 'input window, operand 1, single buffered']
    #allocation5 [shape = 's32[1]{0}', space=sflag, size = 0x4, scoped, tag = 'scoped memory for domain_identifier_forward.1']
    #allocation6 [shape = 'u8[32768]{0}', space=vmem, size = 0x8000, scoped, tag = 'input window, operand 3, single buffered']
    #allocation7 [shape = 'u8[32768]{0}', space=vmem, size = 0x8000, scoped, tag = 'input window, operand 5, single buffered']
    #allocation8 [shape = 's32[1]{0}', space=sflag, size = 0x4, scoped, tag = 'scoped memory for domain_identifier_forward.1']
    %12 = vsyncpa [#allocation3], 0
    %13 = vsyncpa [#allocation5], 0
    %14 = vsyncpa [#allocation8], 0
    // Predicated region
    $region2: #{domain_identifier_forward.1} parent=1 // pred_check
      _
    $region3: #{domain_identifier_forward.1} parent=1 // pred_check_branch
      %16 = sbr.rel (0) target = $region5
    $region4: #{domain_identifier_forward.1} parent=1 // pred_region
      %s18 = ssub.s32 1024, 1024
      %19 = vsyncadd [#allocation3], %s18
      %s20 = sshll.u32 [#allocation2], 4
      %s21 = int_to_ptr.vmem [resolvable:$true] %s20
      %26 = dma.hbm_to_vmem [thread:$0]  %s0, 1024, %s21, [#allocation3], 512, 512, 32
    $region5: #{domain_identifier_forward.1} parent=1 // pred_fallthru
      _
    // Predicated region
    $region6: #{domain_identifier_forward.1} parent=1 // pred_check
      _
    $region7: #{domain_identifier_forward.1} parent=1 // pred_check_branch
      %28 = sbr.rel (0) target = $region9
    $region8: #{domain_identifier_forward.1} parent=1 // pred_region
      %s30 = ssub.s32 4096, 4096
      %31 = vsyncadd [#allocation5], %s30
      %s32 = sshll.u32 [#allocation4], 4
      %s33 = int_to_ptr.vmem [resolvable:$true] %s32
      %38 = dma.hbm_to_vmem [thread:$0]  %s1, 4096, %s33, [#allocation5], 64, 64, 4
    $region9: #{domain_identifier_forward.1} parent=1 // pred_fallthru
      _
    // Predicated region
    $region10: #{domain_identifier_forward.1} parent=1 // pred_check
      _
    $region11: #{domain_identifier_forward.1} parent=1 // pred_check_branch
      %40 = sbr.rel (0) target = $region13
    $region12: #{domain_identifier_forward.1} parent=1 // pred_region
      _
    $region13: #{domain_identifier_forward.1} parent=1 // pred_fallthru
      _
    // Predicated region
    $region14: #{domain_identifier_forward.1} parent=1 // pred_check
      _
    $region15: #{domain_identifier_forward.1} parent=1 // pred_check_branch
      %42 = sbr.rel (0) target = $region17
    $region16: #{domain_identifier_forward.1} parent=1 // pred_region
      %s44 = ssub.s32 1024, 1024
      %45 = vsyncadd [#allocation5], %s44
      %s46 = sshll.u32 [#allocation6], 4
      %s47 = int_to_ptr.vmem [resolvable:$true] %s46
      %52 = dma.hbm_to_vmem [thread:$0]  %s3, 1024, %s47, [#allocation5], 64, 64, 4
    $region17: #{domain_identifier_forward.1} parent=1 // pred_fallthru
      _
    // Predicated region
    $region18: #{domain_identifier_forward.1} parent=1 // pred_check
      _
    $region19: #{domain_identifier_forward.1} parent=1 // pred_check_branch
      %54 = sbr.rel (0) target = $region21
    $region20: #{domain_identifier_forward.1} parent=1 // pred_region
      _
    $region21: #{domain_identifier_forward.1} parent=1 // pred_fallthru
      _
    // Predicated region
    $region22: #{domain_identifier_forward.1} parent=1 // pred_check
      _
    $region23: #{domain_identifier_forward.1} parent=1 // pred_check_branch
      %56 = sbr.rel (0) target = $region25
    $region24: #{domain_identifier_forward.1} parent=1 // pred_region
      %s58 = ssub.s32 1024, 1024
      %59 = vsyncadd [#allocation8], %s58
      %s60 = sshll.u32 [#allocation7], 4
      %s61 = int_to_ptr.vmem [resolvable:$true] %s60
      %66 = dma.hbm_to_vmem [thread:$0]  %s5, 1024, %s61, [#allocation8], 64, 64, 4
    $region25: #{domain_identifier_forward.1} parent=1 // pred_fallthru
      _
    // Predicated region
    $region26: #{domain_identifier_forward.1} parent=1 // pred_check
      _
    $region27: #{domain_identifier_forward.1} parent=1 // pred_check_branch
      %68 = sbr.rel (0) target = $region29
    $region28: #{domain_identifier_forward.1} parent=1 // pred_region
      _
    $region29: #{domain_identifier_forward.1} parent=1 // pred_fallthru
      _
    // Predicated region
    $region30: #{domain_identifier_forward.1} parent=1 // pred_check
      _
    $region31: #{domain_identifier_forward.1} parent=1 // pred_check_branch
      %70 = sbr.rel (0) target = $region33
    $region32: #{domain_identifier_forward.1} parent=1 // pred_region
      %71 = dma.done [#allocation3], 1024
    $region33: #{domain_identifier_forward.1} parent=1 // pred_fallthru
      _
    // Predicated region
    $region34: #{domain_identifier_forward.1} parent=1 // pred_check
      _
    $region35: #{domain_identifier_forward.1} parent=1 // pred_check_branch
      %73 = sbr.rel (0) target = $region37
    $region36: #{domain_identifier_forward.1} parent=1 // pred_region
      %74 = dma.done [#allocation5], 4096
    $region37: #{domain_identifier_forward.1} parent=1 // pred_fallthru
      _
    // Predicated region
    $region38: #{domain_identifier_forward.1} parent=1 // pred_check
      _
    $region39: #{domain_identifier_forward.1} parent=1 // pred_check_branch
      %76 = sbr.rel (0) target = $region41
    $region40: #{domain_identifier_forward.1} parent=1 // pred_region
      %77 = dma.done [#allocation5], 1024
    $region41: #{domain_identifier_forward.1} parent=1 // pred_fallthru
      _
    // Predicated region
    $region42: #{domain_identifier_forward.1} parent=1 // pred_check
      _
    $region43: #{domain_identifier_forward.1} parent=1 // pred_check_branch
      %79 = sbr.rel (0) target = $region45
    $region44: #{domain_identifier_forward.1} parent=1 // pred_region
      %80 = dma.done [#allocation8], 1024
    $region45: #{domain_identifier_forward.1} parent=1 // pred_fallthru
      _
    %v82 = vld [vmem:[#allocation2] sm:$0xff]
    %v83 = vld [vmem:[#allocation2 + $0x8] sm:$0xff]
    %v84 = vld [vmem:[#allocation2 + $0x10] sm:$0xff]
    %v85 = vld [vmem:[#allocation2 + $0x18] sm:$0xff]
    %v86 = vld [vmem:[#allocation2 + $0x20] sm:$0xff]
    %v87 = vld [vmem:[#allocation2 + $0x28] sm:$0xff]
    %v88 = vld [vmem:[#allocation2 + $0x30] sm:$0xff]
    %v89 = vld [vmem:[#allocation2 + $0x38] sm:$0xff]
    %v90 = vpack.c.bf16 %v86, %v82
    %v91 = vpack.c.bf16 %v87, %v83
    %v92 = vpack.c.bf16 %v88, %v84
    %v93 = vpack.c.bf16 %v89, %v85
    %v94 = vld [vmem:[#allocation4] sm:$0xf]
    %v95 = vld [vmem:[#allocation4 + $0x4] sm:$0xf]
    %v96 = vld [vmem:[#allocation4 + $0x8] sm:$0xf]
    %v97 = vld [vmem:[#allocation4 + $0xc] sm:$0xf]
    %v98 = vld [vmem:[#allocation4 + $0x10] sm:$0xf]
    %v99 = vld [vmem:[#allocation4 + $0x14] sm:$0xf]
    %v100 = vld [vmem:[#allocation4 + $0x18] sm:$0xf]
    %v101 = vld [vmem:[#allocation4 + $0x1c] sm:$0xf]
    %v102 = vld [vmem:[#allocation4 + $0x20] sm:$0xf]
    %v103 = vld [vmem:[#allocation4 + $0x24] sm:$0xf]
    %v104 = vld [vmem:[#allocation4 + $0x28] sm:$0xf]
    %v105 = vld [vmem:[#allocation4 + $0x2c] sm:$0xf]
    %v106 = vld [vmem:[#allocation4 + $0x30] sm:$0xf]
    %v107 = vld [vmem:[#allocation4 + $0x34] sm:$0xf]
    %v108 = vld [vmem:[#allocation4 + $0x38] sm:$0xf]
    %v109 = vld [vmem:[#allocation4 + $0x3c] sm:$0xf]
    %v110 = vld [vmem:[#allocation4 + $0x40] sm:$0xf]
    %v111 = vld [vmem:[#allocation4 + $0x44] sm:$0xf]
    %v112 = vld [vmem:[#allocation4 + $0x48] sm:$0xf]
    %v113 = vld [vmem:[#allocation4 + $0x4c] sm:$0xf]
    %v114 = vld [vmem:[#allocation4 + $0x50] sm:$0xf]
    %v115 = vld [vmem:[#allocation4 + $0x54] sm:$0xf]
    %v116 = vld [vmem:[#allocation4 + $0x58] sm:$0xf]
    %v117 = vld [vmem:[#allocation4 + $0x5c] sm:$0xf]
    %v118 = vld [vmem:[#allocation4 + $0x60] sm:$0xf]
    %v119 = vld [vmem:[#allocation4 + $0x64] sm:$0xf]
    %v120 = vld [vmem:[#allocation4 + $0x68] sm:$0xf]
    %v121 = vld [vmem:[#allocation4 + $0x6c] sm:$0xf]
    %v122 = vld [vmem:[#allocation4 + $0x70] sm:$0xf]
    %v123 = vld [vmem:[#allocation4 + $0x74] sm:$0xf]
    %v124 = vld [vmem:[#allocation4 + $0x78] sm:$0xf]
    %v125 = vld [vmem:[#allocation4 + $0x7c] sm:$0xf]
    %v126 = vld [vmem:[#allocation4 + $0x80] sm:$0xf]
    %v127 = vld [vmem:[#allocation4 + $0x84] sm:$0xf]
    %v128 = vld [vmem:[#allocation4 + $0x88] sm:$0xf]
    %v129 = vld [vmem:[#allocation4 + $0x8c] sm:$0xf]
    %v130 = vld [vmem:[#allocation4 + $0x90] sm:$0xf]
    %v131 = vld [vmem:[#allocation4 + $0x94] sm:$0xf]
    %v132 = vld [vmem:[#allocation4 + $0x98] sm:$0xf]
    %v133 = vld [vmem:[#allocation4 + $0x9c] sm:$0xf]
    %v134 = vld [vmem:[#allocation4 + $0xa0] sm:$0xf]
    %v135 = vld [vmem:[#allocation4 + $0xa4] sm:$0xf]
    %v136 = vld [vmem:[#allocation4 + $0xa8] sm:$0xf]
    %v137 = vld [vmem:[#allocation4 + $0xac] sm:$0xf]
    %v138 = vld [vmem:[#allocation4 + $0xb0] sm:$0xf]
    %v139 = vld [vmem:[#allocation4 + $0xb4] sm:$0xf]
    %v140 = vld [vmem:[#allocation4 + $0xb8] sm:$0xf]
    %v141 = vld [vmem:[#allocation4 + $0xbc] sm:$0xf]
    %v142 = vld [vmem:[#allocation4 + $0xc0] sm:$0xf]
    %v143 = vld [vmem:[#allocation4 + $0xc4] sm:$0xf]
    %v144 = vld [vmem:[#allocation4 + $0xc8] sm:$0xf]
    %v145 = vld [vmem:[#allocation4 + $0xcc] sm:$0xf]
    %v146 = vld [vmem:[#allocation4 + $0xd0] sm:$0xf]
    %v147 = vld [vmem:[#allocation4 + $0xd4] sm:$0xf]
    %v148 = vld [vmem:[#allocation4 + $0xd8] sm:$0xf]
    %v149 = vld [vmem:[#allocation4 + $0xdc] sm:$0xf]
    %v150 = vld [vmem:[#allocation4 + $0xe0] sm:$0xf]
    %v151 = vld [vmem:[#allocation4 + $0xe4] sm:$0xf]
    %v152 = vld [vmem:[#allocation4 + $0xe8] sm:$0xf]
    %v153 = vld [vmem:[#allocation4 + $0xec] sm:$0xf]
    %v154 = vld [vmem:[#allocation4 + $0xf0] sm:$0xf]
    %v155 = vld [vmem:[#allocation4 + $0xf4] sm:$0xf]
    %v156 = vld [vmem:[#allocation4 + $0xf8] sm:$0xf]
    %v157 = vld [vmem:[#allocation4 + $0xfc] sm:$0xf]
    %v158 = vld [vmem:[%s2] sm:$0x1]
    %v160 = vlaneseq
    %v161 = vshrl.u32 %v160, 7
    %v162 = vsub.s32 0, %v161
    %v163 = vrot.slane %v158, %v162
    %v229 = vunpack.c.l.b16 %v94
    %v230 = vunpack.c.l.b16 %v95
    %v231 = vunpack.c.l.b16 %v96
    %v232 = vunpack.c.l.b16 %v97
    %v233 = vunpack.c.l.b16 %v98
    %v234 = vunpack.c.l.b16 %v99
    %v235 = vunpack.c.l.b16 %v100
    %v236 = vunpack.c.l.b16 %v101
    %v237 = vunpack.c.l.b16 %v102
    %v238 = vunpack.c.l.b16 %v103
    %v239 = vunpack.c.l.b16 %v104
    %v240 = vunpack.c.l.b16 %v105
    %v241 = vunpack.c.l.b16 %v106
    %v242 = vunpack.c.l.b16 %v107
    %v243 = vunpack.c.l.b16 %v108
    %v244 = vunpack.c.l.b16 %v109
    %v245 = vunpack.c.l.b16 %v110
    %v246 = vunpack.c.l.b16 %v111
    %v247 = vunpack.c.l.b16 %v112
    %v248 = vunpack.c.l.b16 %v113
    %v249 = vunpack.c.l.b16 %v114
    %v250 = vunpack.c.l.b16 %v115
    %v251 = vunpack.c.l.b16 %v116
    %v252 = vunpack.c.l.b16 %v117
    %v253 = vunpack.c.l.b16 %v118
    %v254 = vunpack.c.l.b16 %v119
    %v255 = vunpack.c.l.b16 %v120
    %v256 = vunpack.c.l.b16 %v121
    %v257 = vunpack.c.l.b16 %v122
    %v258 = vunpack.c.l.b16 %v123
    %v259 = vunpack.c.l.b16 %v124
    %v260 = vunpack.c.l.b16 %v125
    %v261 = vunpack.c.l.b16 %v126
    %v262 = vunpack.c.l.b16 %v127
    %v263 = vunpack.c.l.b16 %v128
    %v264 = vunpack.c.l.b16 %v129
    %v265 = vunpack.c.l.b16 %v130
    %v266 = vunpack.c.l.b16 %v131
    %v267 = vunpack.c.l.b16 %v132
    %v268 = vunpack.c.l.b16 %v133
    %v269 = vunpack.c.l.b16 %v134
    %v270 = vunpack.c.l.b16 %v135
    %v271 = vunpack.c.l.b16 %v136
    %v272 = vunpack.c.l.b16 %v137
    %v273 = vunpack.c.l.b16 %v138
    %v274 = vunpack.c.l.b16 %v139
    %v275 = vunpack.c.l.b16 %v140
    %v276 = vunpack.c.l.b16 %v141
    %v277 = vunpack.c.l.b16 %v142
    %v278 = vunpack.c.l.b16 %v143
    %v279 = vunpack.c.l.b16 %v144
    %v280 = vunpack.c.l.b16 %v145
    %v281 = vunpack.c.l.b16 %v146
    %v282 = vunpack.c.l.b16 %v147
    %v283 = vunpack.c.l.b16 %v148
    %v284 = vunpack.c.l.b16 %v149
    %v285 = vunpack.c.l.b16 %v150
    %v286 = vunpack.c.l.b16 %v151
    %v287 = vunpack.c.l.b16 %v152
    %v288 = vunpack.c.l.b16 %v153
    %v289 = vunpack.c.l.b16 %v154
    %v290 = vunpack.c.l.b16 %v155
    %v291 = vunpack.c.l.b16 %v156
    %v292 = vunpack.c.l.b16 %v157
    %v293 = vpack.c.b16 %v230, %v229
    %v294 = vpack.c.b16 %v232, %v231
    %v295 = vpack.c.b16 %v234, %v233
    %v296 = vpack.c.b16 %v236, %v235
    %v297 = vpack.c.b16 %v238, %v237
    %v298 = vpack.c.b16 %v240, %v239
    %v299 = vpack.c.b16 %v242, %v241
    %v300 = vpack.c.b16 %v244, %v243
    %v301 = vpack.c.b16 %v246, %v245
    %v302 = vpack.c.b16 %v248, %v247
    %v303 = vpack.c.b16 %v250, %v249
    %v304 = vpack.c.b16 %v252, %v251
    %v305 = vpack.c.b16 %v254, %v253
    %v306 = vpack.c.b16 %v256, %v255
    %v307 = vpack.c.b16 %v258, %v257
    %v308 = vpack.c.b16 %v260, %v259
    %v309 = vpack.c.b16 %v262, %v261
    %v310 = vpack.c.b16 %v264, %v263
    %v311 = vpack.c.b16 %v266, %v265
    %v312 = vpack.c.b16 %v268, %v267
    %v313 = vpack.c.b16 %v270, %v269
    %v314 = vpack.c.b16 %v272, %v271
    %v315 = vpack.c.b16 %v274, %v273
    %v316 = vpack.c.b16 %v276, %v275
    %v317 = vpack.c.b16 %v278, %v277
    %v318 = vpack.c.b16 %v280, %v279
    %v319 = vpack.c.b16 %v282, %v281
    %v320 = vpack.c.b16 %v284, %v283
    %v321 = vpack.c.b16 %v286, %v285
    %v322 = vpack.c.b16 %v288, %v287
    %v323 = vpack.c.b16 %v290, %v289
    %v324 = vpack.c.b16 %v292, %v291
    %357 = vmatprep.subr.bf16.mxu0 0
    %358 = vmatpush1.bf16.msra.mxu0 %v300
    %359 = vmatprep.subr.bf16.mxu0 0
    %360 = vmatpush1.bf16.msra.mxu0 %v299
    %361 = vmatprep.subr.bf16.mxu0 0
    %362 = vmatpush1.bf16.msra.mxu0 %v298
    %363 = vmatprep.subr.bf16.mxu0 0
    %364 = vmatpush1.bf16.msra.mxu0 %v297
    %365 = vmatprep.subr.bf16.mxu0 0
    %366 = vmatpush1.bf16.msra.mxu0 %v296
    %367 = vmatprep.subr.bf16.mxu0 0
    %368 = vmatpush1.bf16.msra.mxu0 %v295
    %369 = vmatprep.subr.bf16.mxu0 0
    %370 = vmatpush1.bf16.msra.mxu0 %v294
    %371 = vmatprep.subr.bf16.mxu0 0
    %372 = vmatpush1.bf16.msra.mxu0 %v293
    %373 = vmatprep.subr.bf16.mxu0 0
    %374 = vmatpush2.bf16.msra.mxu0 %v308
    %375 = vmatprep.subr.bf16.mxu0 0
    %376 = vmatpush2.bf16.msra.mxu0 %v307
    %377 = vmatprep.subr.bf16.mxu0 0
    %378 = vmatpush2.bf16.msra.mxu0 %v306
    %379 = vmatprep.subr.bf16.mxu0 0
    %380 = vmatpush2.bf16.msra.mxu0 %v305
    %381 = vmatprep.subr.bf16.mxu0 0
    %382 = vmatpush2.bf16.msra.mxu0 %v304
    %383 = vmatprep.subr.bf16.mxu0 0
    %384 = vmatpush2.bf16.msra.mxu0 %v303
    %385 = vmatprep.subr.bf16.mxu0 0
    %386 = vmatpush2.bf16.msra.mxu0 %v302
    %387 = vmatprep.subr.bf16.mxu0 0
    %388 = vmatpush2.bf16.msra.mxu0 %v301
    %389 = vmatprep.mubr.bf16.mxu0 %v91
    %390 = vmatmul.mubr.bf16.gmra.mxu0 %v90
    %v391 = vpop.f32.mrf.mxu0
    %v392 = vadd.f32 %v163, %v391
    %v393 = vpop.f32.mrf.mxu0
    %v394 = vpop.f32.mrf.mxu0
    %v395 = vadd.f32 %v163, %v394
    %v396 = vpop.f32.mrf.mxu0
    %397 = vdwg.mxu0
    %398 = vmatprep.subr.bf16.mxu0 0
    %399 = vmatpush1.bf16.msra.mxu0 %v316
    %400 = vmatprep.subr.bf16.mxu0 0
    %401 = vmatpush1.bf16.msra.mxu0 %v315
    %402 = vmatprep.subr.bf16.mxu0 0
    %403 = vmatpush1.bf16.msra.mxu0 %v314
    %404 = vmatprep.subr.bf16.mxu0 0
    %405 = vmatpush1.bf16.msra.mxu0 %v313
    %406 = vmatprep.subr.bf16.mxu0 0
    %407 = vmatpush1.bf16.msra.mxu0 %v312
    %408 = vmatprep.subr.bf16.mxu0 0
    %409 = vmatpush1.bf16.msra.mxu0 %v311
    %410 = vmatprep.subr.bf16.mxu0 0
    %411 = vmatpush1.bf16.msra.mxu0 %v310
    %412 = vmatprep.subr.bf16.mxu0 0
    %413 = vmatpush1.bf16.msra.mxu0 %v309
    %414 = vmatprep.subr.bf16.mxu0 0
    %415 = vmatpush2.bf16.msra.mxu0 %v324
    %416 = vmatprep.subr.bf16.mxu0 0
    %417 = vmatpush2.bf16.msra.mxu0 %v323
    %418 = vmatprep.subr.bf16.mxu0 0
    %419 = vmatpush2.bf16.msra.mxu0 %v322
    %420 = vmatprep.subr.bf16.mxu0 0
    %421 = vmatpush2.bf16.msra.mxu0 %v321
    %422 = vmatprep.subr.bf16.mxu0 0
    %423 = vmatpush2.bf16.msra.mxu0 %v320
    %424 = vmatprep.subr.bf16.mxu0 0
    %425 = vmatpush2.bf16.msra.mxu0 %v319
    %426 = vmatprep.subr.bf16.mxu0 0
    %427 = vmatpush2.bf16.msra.mxu0 %v318
    %428 = vmatprep.subr.bf16.mxu0 0
    %429 = vmatpush2.bf16.msra.mxu0 %v317
    %430 = vmatprep.mubr.bf16.mxu0 %v93
    %431 = vmatmul.mubr.bf16.gmra.mxu0 %v92
    %v432 = vpop.f32.mrf.mxu0
    %v433 = vadd.f32 %v392, %v432
    %v434 = vpop.f32.mrf.mxu0
    %v435 = vpop.f32.mrf.mxu0
    %v436 = vadd.f32 %v395, %v435
    %v437 = vpop.f32.mrf.mxu0
    %438 = vdwg.mxu0
    %v439 = vmax.f32 %v433, 0.0
    %v440 = vmax.f32 %v436, 0.0
    %v441 = vpack.c.bf16 %v440, %v439
    %v442 = vld [vmem:[#allocation6] sm:$0xf]
    %v443 = vld [vmem:[#allocation6 + $0x4] sm:$0xf]
    %v444 = vld [vmem:[#allocation6 + $0x8] sm:$0xf]
    %v445 = vld [vmem:[#allocation6 + $0xc] sm:$0xf]
    %v446 = vld [vmem:[#allocation6 + $0x10] sm:$0xf]
    %v447 = vld [vmem:[#allocation6 + $0x14] sm:$0xf]
    %v448 = vld [vmem:[#allocation6 + $0x18] sm:$0xf]
    %v449 = vld [vmem:[#allocation6 + $0x1c] sm:$0xf]
    %v450 = vld [vmem:[#allocation6 + $0x20] sm:$0xf]
    %v451 = vld [vmem:[#allocation6 + $0x24] sm:$0xf]
    %v452 = vld [vmem:[#allocation6 + $0x28] sm:$0xf]
    %v453 = vld [vmem:[#allocation6 + $0x2c] sm:$0xf]
    %v454 = vld [vmem:[#allocation6 + $0x30] sm:$0xf]
    %v455 = vld [vmem:[#allocation6 + $0x34] sm:$0xf]
    %v456 = vld [vmem:[#allocation6 + $0x38] sm:$0xf]
    %v457 = vld [vmem:[#allocation6 + $0x3c] sm:$0xf]
    %v458 = vld [vmem:[%s4] sm:$0x1]
    %v460 = vlaneseq
    %v461 = vshrl.u32 %v460, 7
    %v462 = vsub.s32 0, %v461
    %v463 = vrot.slane %v458, %v462
    %v481 = vunpack.c.l.b16 %v442
    %v482 = vunpack.c.l.b16 %v443
    %v483 = vunpack.c.l.b16 %v444
    %v484 = vunpack.c.l.b16 %v445
    %v485 = vunpack.c.l.b16 %v446
    %v486 = vunpack.c.l.b16 %v447
    %v487 = vunpack.c.l.b16 %v448
    %v488 = vunpack.c.l.b16 %v449
    %v489 = vunpack.c.l.b16 %v450
    %v490 = vunpack.c.l.b16 %v451
    %v491 = vunpack.c.l.b16 %v452
    %v492 = vunpack.c.l.b16 %v453
    %v493 = vunpack.c.l.b16 %v454
    %v494 = vunpack.c.l.b16 %v455
    %v495 = vunpack.c.l.b16 %v456
    %v496 = vunpack.c.l.b16 %v457
    %v497 = vpack.c.b16 %v482, %v481
    %v498 = vpack.c.b16 %v484, %v483
    %v499 = vpack.c.b16 %v486, %v485
    %v500 = vpack.c.b16 %v488, %v487
    %v501 = vpack.c.b16 %v490, %v489
    %v502 = vpack.c.b16 %v492, %v491
    %v503 = vpack.c.b16 %v494, %v493
    %v504 = vpack.c.b16 %v496, %v495
    %513 = vmatprep.subr.bf16.mxu0 0
    %514 = vmatpush1.bf16.msra.mxu0 %v504
    %515 = vmatprep.subr.bf16.mxu0 0
    %516 = vmatpush1.bf16.msra.mxu0 %v503
    %517 = vmatprep.subr.bf16.mxu0 0
    %518 = vmatpush1.bf16.msra.mxu0 %v502
    %519 = vmatprep.subr.bf16.mxu0 0
    %520 = vmatpush1.bf16.msra.mxu0 %v501
    %521 = vmatprep.subr.bf16.mxu0 0
    %522 = vmatpush1.bf16.msra.mxu0 %v500
    %523 = vmatprep.subr.bf16.mxu0 0
    %524 = vmatpush1.bf16.msra.mxu0 %v499
    %525 = vmatprep.subr.bf16.mxu0 0
    %526 = vmatpush1.bf16.msra.mxu0 %v498
    %527 = vmatprep.subr.bf16.mxu0 0
    %528 = vmatpush1.bf16.msra.mxu0 %v497
    %529 = vmatprep.subr.bf16.mxu0 0
    %530 = vmatpush2.bf16.msra.mxu0 0
    %531 = vmatprep.subr.bf16.mxu0 0
    %532 = vmatpush2.bf16.msra.mxu0 0
    %533 = vmatprep.subr.bf16.mxu0 0
    %534 = vmatpush2.bf16.msra.mxu0 0
    %535 = vmatprep.subr.bf16.mxu0 0
    %536 = vmatpush2.bf16.msra.mxu0 0
    %537 = vmatprep.subr.bf16.mxu0 0
    %538 = vmatpush2.bf16.msra.mxu0 0
    %539 = vmatprep.subr.bf16.mxu0 0
    %540 = vmatpush2.bf16.msra.mxu0 0
    %541 = vmatprep.subr.bf16.mxu0 0
    %542 = vmatpush2.bf16.msra.mxu0 0
    %543 = vmatprep.subr.bf16.mxu0 0
    %544 = vmatpush2.bf16.msra.mxu0 0
    %545 = vmatprep.mubr.bf16.mxu0 0
    %546 = vmatmul.mubr.bf16.gmra.mxu0 %v441
    %v547 = vpop.f32.mrf.mxu0
    %v548 = vadd.f32 %v463, %v547
    %v549 = vpop.f32.mrf.mxu0
    %v550 = vpop.f32.mrf.mxu0
    %v551 = vadd.f32 %v463, %v550
    %v552 = vpop.f32.mrf.mxu0
    %553 = vdwg.mxu0
    %v554 = vmax.f32 %v548, 0.0
    %v555 = vmax.f32 %v551, 0.0
    %v556 = vpack.c.bf16 %v555, %v554
    %v557 = vld [vmem:[#allocation7] sm:$0xf]
    %v558 = vld [vmem:[#allocation7 + $0x4] sm:$0xf]
    %v559 = vld [vmem:[#allocation7 + $0x8] sm:$0xf]
    %v560 = vld [vmem:[#allocation7 + $0xc] sm:$0xf]
    %v561 = vld [vmem:[#allocation7 + $0x10] sm:$0xf]
    %v562 = vld [vmem:[#allocation7 + $0x14] sm:$0xf]
    %v563 = vld [vmem:[#allocation7 + $0x18] sm:$0xf]
    %v564 = vld [vmem:[#allocation7 + $0x1c] sm:$0xf]
    %v565 = vld [vmem:[#allocation7 + $0x20] sm:$0xf]
    %v566 = vld [vmem:[#allocation7 + $0x24] sm:$0xf]
    %v567 = vld [vmem:[#allocation7 + $0x28] sm:$0xf]
    %v568 = vld [vmem:[#allocation7 + $0x2c] sm:$0xf]
    %v569 = vld [vmem:[#allocation7 + $0x30] sm:$0xf]
    %v570 = vld [vmem:[#allocation7 + $0x34] sm:$0xf]
    %v571 = vld [vmem:[#allocation7 + $0x38] sm:$0xf]
    %v572 = vld [vmem:[#allocation7 + $0x3c] sm:$0xf]
    %v573 = vld [vmem:[%s6] sm:$0x1]
    %v575 = vlaneseq
    %v576 = vshrl.u32 %v575, 7
    %v577 = vsub.s32 0, %v576
    %v578 = vrot.slane %v573, %v577
    %v596 = vunpack.c.l.b16 %v557
    %v597 = vunpack.c.l.b16 %v558
    %v598 = vunpack.c.l.b16 %v559
    %v599 = vunpack.c.l.b16 %v560
    %v600 = vunpack.c.l.b16 %v561
    %v601 = vunpack.c.l.b16 %v562
    %v602 = vunpack.c.l.b16 %v563
    %v603 = vunpack.c.l.b16 %v564
    %v604 = vunpack.c.l.b16 %v565
    %v605 = vunpack.c.l.b16 %v566
    %v606 = vunpack.c.l.b16 %v567
    %v607 = vunpack.c.l.b16 %v568
    %v608 = vunpack.c.l.b16 %v569
    %v609 = vunpack.c.l.b16 %v570
    %v610 = vunpack.c.l.b16 %v571
    %v611 = vunpack.c.l.b16 %v572
    %v612 = vpack.c.b16 %v597, %v596
    %v613 = vpack.c.b16 %v599, %v598
    %v614 = vpack.c.b16 %v601, %v600
    %v615 = vpack.c.b16 %v603, %v602
    %v616 = vpack.c.b16 %v605, %v604
    %v617 = vpack.c.b16 %v607, %v606
    %v618 = vpack.c.b16 %v609, %v608
    %v619 = vpack.c.b16 %v611, %v610
    %628 = vmatprep.subr.bf16.mxu0 0
    %629 = vmatpush1.bf16.msra.mxu0 %v619
    %630 = vmatprep.subr.bf16.mxu0 0
    %631 = vmatpush1.bf16.msra.mxu0 %v618
    %632 = vmatprep.subr.bf16.mxu0 0
    %633 = vmatpush1.bf16.msra.mxu0 %v617
    %634 = vmatprep.subr.bf16.mxu0 0
    %635 = vmatpush1.bf16.msra.mxu0 %v616
    %636 = vmatprep.subr.bf16.mxu0 0
    %637 = vmatpush1.bf16.msra.mxu0 %v615
    %638 = vmatprep.subr.bf16.mxu0 0
    %639 = vmatpush1.bf16.msra.mxu0 %v614
    %640 = vmatprep.subr.bf16.mxu0 0
    %641 = vmatpush1.bf16.msra.mxu0 %v613
    %642 = vmatprep.subr.bf16.mxu0 0
    %643 = vmatpush1.bf16.msra.mxu0 %v612
    %644 = vmatprep.subr.bf16.mxu0 0
    %645 = vmatpush2.bf16.msra.mxu0 0
    %646 = vmatprep.subr.bf16.mxu0 0
    %647 = vmatpush2.bf16.msra.mxu0 0
    %648 = vmatprep.subr.bf16.mxu0 0
    %649 = vmatpush2.bf16.msra.mxu0 0
    %650 = vmatprep.subr.bf16.mxu0 0
    %651 = vmatpush2.bf16.msra.mxu0 0
    %652 = vmatprep.subr.bf16.mxu0 0
    %653 = vmatpush2.bf16.msra.mxu0 0
    %654 = vmatprep.subr.bf16.mxu0 0
    %655 = vmatpush2.bf16.msra.mxu0 0
    %656 = vmatprep.subr.bf16.mxu0 0
    %657 = vmatpush2.bf16.msra.mxu0 0
    %658 = vmatprep.subr.bf16.mxu0 0
    %659 = vmatpush2.bf16.msra.mxu0 0
    %660 = vmatprep.mubr.bf16.mxu0 0
    %661 = vmatmul.mubr.bf16.gmra.mxu0 %v556
    %v662 = vpop.f32.mrf.mxu0
    %v663 = vadd.f32 %v578, %v662
    %v664 = vpop.f32.mrf.mxu0
    %v665 = vpop.f32.mrf.mxu0
    %v666 = vadd.f32 %v578, %v665
    %v667 = vpop.f32.mrf.mxu0
    %668 = vdwg.mxu0
    %v669 = vmax.f32 %v663, 0.0
    %v670 = vmax.f32 %v666, 0.0
    %v671 = vpack.c.bf16 %v670, %v669
    %v673 = vunpack.c.l.b16 %v671
    %v674 = vunpack.c.h.b16 %v671
    %v675 = vpack.c.b16 %v673, %v673
    %v676 = vpack.c.b16 %v674, %v674
    %679 = vst [vmem:[%s7] sm:$0xf] %v675
    %680 = vst [vmem:[%s7 + $0x4] sm:$0xf] %v676
    // Predicated region
    $region46: #{domain_identifier_forward.1} parent=1 // pred_check
      _
    $region47: #{domain_identifier_forward.1} parent=1 // pred_check_branch
      %682 = sbr.rel (0) target = $region49
    $region48: #{domain_identifier_forward.1} parent=1 // pred_region
      _
    $region49: #{domain_identifier_forward.1} parent=1 // pred_fallthru
      _
    // Predicated region
    $region50: #{domain_identifier_forward.1} parent=1 // pred_check
      _
    $region51: #{domain_identifier_forward.1} parent=1 // pred_check_branch
      %684 = sbr.rel (0) target = $region53
    $region52: #{domain_identifier_forward.1} parent=1 // pred_region
      _
    $region53: #{domain_identifier_forward.1} parent=1 // pred_fallthru
      _
    %685 = vsyncpa [#allocation3], 1
    %686 = vsyncpa [#allocation5], 1
    %687 = vsyncpa [#allocation8], 1

</llo_original>
